<compile_context>
chip_gen: v5e
topology: v5e:2x2
jax: 0.10.0
libtpu: 0.0.40
codegen_flags: <defaults>
</compile_context>

<pallas_src>
import functools

import jax
import jax.numpy as jnp
from jax import lax
from jax.experimental import pallas as pl
from jax.experimental.pallas import tpu as pltpu

ALPHA = 3            # focal alpha (static python int -> exact repeated multiplies)
BETA = 4             # focal beta
NEEDS_SIGMOID = True

_LANES = 128
_SUBLANES = 8
_MAX_BLOCK_ROWS = 4096   # 4096*128*4B = 2 MiB per input per pipeline buffer
_PRED_CLAMP = 30.0       # keeps exp(-pred) finite in f32 (matches ref within eps regime)


def _round_up(x: int, m: int) -> int:
    return (x + m - 1) // m * m


def _cdiv(a: int, b: int) -> int:
    return -(-a // b)


def _focal_kernel(pred_ref, gt_ref, loss_out, npos_out, *,
                  needs_row_mask, last_block_rows):
    j = pl.program_id(0)

    @pl.when(j == 0)
    def _init():
        loss_out[...] = jnp.zeros_like(loss_out)
        npos_out[...] = jnp.zeros_like(npos_out)

    pred = pred_ref[...].astype(jnp.float32)
    gt = gt_ref[...].astype(jnp.float32)

    # --- stable log-sigmoid rewrite: one exp + one log + one approx reciprocal ---
    if NEEDS_SIGMOID:
        pred_c = jnp.clip(pred, -_PRED_CLAMP, _PRED_CLAMP)
        e = jnp.exp(-pred_c)                      # EUP
        d = 1.0 + e
        r = pl.reciprocal(d, approx=True)         # EUP (cheap)
        p = r * (2.0 - d * r)                     # one Newton step (VPU) -> ~f32 accuracy
        one_minus_p = e * p                       # = 1 - sigmoid(pred), no cancellation
        lp1e = jnp.log(d)                         # EUP; = -log(sigmoid(pred))
        log_p = -lp1e                             # log(sigmoid(pred))
        log_1mp = -pred_c - lp1e                  # log(1 - sigmoid(pred))
    else:
        p = pred
        one_minus_p = 1.0 - p
        log_p = jnp.log(p + 1e-12)
        log_1mp = jnp.log(1.0 - p + 1e-7)

    pos_inds = jnp.where(gt == 1.0, 1.0, 0.0)

    # ALPHA=3, BETA=4 as explicit repeated multiplies (no pow, no extra masks).
    t = 1.0 - gt
    t2 = t * t
    neg_w = t2 * t2                               # (1-gt)^4; exactly 0 wherever gt == 1,
    #                                               so the reference's (gt < 1) mask is redundant.
    omp3 = one_minus_p * one_minus_p * one_minus_p
    p3 = p * p * p
    loss = omp3 * log_p * pos_inds + neg_w * p3 * log_1mp

    def _accumulate(loss_v, pos_v):
        # Fold the (block_rows, 128) tile into the resident (8, 128) output blocks:
        # one VPU add per vreg, no accumulator load/store traffic.
        loss_out[...] += loss_v.reshape(-1, _SUBLANES, _LANES).sum(axis=0)
        npos_out[...] += pos_v.reshape(-1, _SUBLANES, _LANES).sum(axis=0)

    if needs_row_mask:
        # Only the last block can extend past the array; mask its out-of-bounds rows.
        last = pl.num_programs(0) - 1

        @pl.when(j != last)
        def _steady():
            _accumulate(loss, pos_inds)

        @pl.when(j == last)
        def _ragged():
            row = lax.broadcasted_iota(jnp.int32, loss.shape, 0)
            valid = row < last_block_rows
            _accumulate(jnp.where(valid, loss, 0.0),
                        jnp.where(valid, pos_inds, 0.0))
    else:
        _accumulate(loss, pos_inds)


def focal_loss_heatmap(pred: jax.Array, gt: jax.Array) -> jax.Array:
    """Pallas implementation of FocalLoss.forward(pred, gt) with default init args."""
    assert pred.shape == gt.shape
    total = 1
    for d in pred.shape:
        total *= int(d)

    rows = _cdiv(total, _LANES)
    rows_padded = _round_up(rows, _SUBLANES)          # keeps the (8,128) reshape legal
    block_rows = min(_MAX_BLOCK_ROWS, rows_padded)
    n_blocks = _cdiv(rows_padded, block_rows)
    needs_row_mask = (rows_padded % block_rows) != 0  # only possible for huge inputs
    last_block_rows = rows_padded - (n_blocks - 1) * block_rows

    padded_total = rows_padded * _LANES
    if padded_total == total:
        # Zero-copy: contiguous reshape, no extra HBM pass.
        pred2d = pred.reshape(rows_padded, _LANES)
        gt2d = gt.reshape(rows_padded, _LANES)
    else:
        # Self-cancelling pad: gt=0 -> pos_inds=0 (kills pos term & num_pos);
        # pred=-30 -> sigmoid^3 ~ 8e-40, each padded element adds < 1e-52 to neg term.
        pad = padded_total - total
        pred2d = jnp.pad(pred.reshape(-1), (0, pad),
                         constant_values=-_PRED_CLAMP).reshape(rows_padded, _LANES)
        gt2d = jnp.pad(gt.reshape(-1), (0, pad),
                       constant_values=0.0).reshape(rows_padded, _LANES)

    kernel = functools.partial(_focal_kernel,
                               needs_row_mask=needs_row_mask,
                               last_block_rows=last_block_rows)

    in_spec = pl.BlockSpec((block_rows, _LANES), lambda j: (j, 0))
    out_spec = pl.BlockSpec((_SUBLANES, _LANES), lambda j: (0, 0))   # resident accumulator
    out_shape = (jax.ShapeDtypeStruct((_SUBLANES, _LANES), jnp.float32),
                 jax.ShapeDtypeStruct((_SUBLANES, _LANES), jnp.float32))

    loss_part, npos_part = pl.pallas_call(
        kernel,
        out_shape=out_shape,
        grid=(n_blocks,),
        in_specs=[in_spec, in_spec],
        out_specs=(out_spec, out_spec),
        compiler_params=pltpu.CompilerParams(
            dimension_semantics=("arbitrary",),
        ),
    )(pred2d, gt2d)

    loss_sum = jnp.sum(loss_part)     # tiny (8,128) reductions in XLA
    num_pos = jnp.sum(npos_part)
    # Reference: -neg_sum if num_pos==0 else -(pos+neg)/num_pos.  Since the positive
    # sum is exactly 0 whenever num_pos==0, both branches equal -loss_sum/max(np,1).
    return -loss_sum / jnp.maximum(num_pos, 1.0)


def _reference(pred, gt):
    """Direct transcription of the PyTorch module (default args)."""
    p = jax.nn.sigmoid(pred.astype(jnp.float32))
    gt = gt.astype(jnp.float32)
    pos_inds = (gt == 1.0).astype(jnp.float32)
    neg_inds = (gt < 1.0).astype(jnp.float32)
    neg_w = (1.0 - gt) ** BETA
    pos_loss = (1.0 - p) ** ALPHA * jnp.log(p + 1e-12) * pos_inds
    neg_loss = neg_w * p ** ALPHA * jnp.log(1.0 - p + 1e-7) * neg_inds
    num_pos = pos_inds.sum()
    return jnp.where(num_pos == 0.0,
                     -neg_loss.sum(),
                     -(pos_loss.sum() + neg_loss.sum()) / jnp.maximum(num_pos, 1.0))


def _make_inputs(key, shape):
    k1, k2, k3 = jax.random.split(key, 3)
    pred = jax.random.normal(k1, shape, dtype=jnp.float32)
    # Heatmap-style ground truth in [0, 1] with a few exact 1.0 peaks.
    gt = jax.random.uniform(k2, shape, dtype=jnp.float32, minval=0.0, maxval=0.95)
    peak_mask = jax.random.uniform(k3, shape) > 0.98
    gt = jnp.where(peak_mask, 1.0, gt)
    return pred, gt


if __name__ == "__main__":
    key = jax.random.PRNGKey(0)
    key_main, key_ragged = jax.random.split(key)

    # Main check: NCHW heatmap, total divisible by 1024 -> zero-copy fast path.
    pred, gt = _make_inputs(key_main, (2, 4, 16, 16))
    loss = focal_loss_heatmap(pred, gt)
    jax.block_until_ready(loss)
    ref = _reference(pred, gt)
    assert jnp.allclose(loss, ref, rtol=1e-4, atol=1e-4), (loss, ref)

    # Ragged check: total not a multiple of 128 -> self-cancelling pad path.
    pred_r, gt_r = _make_inputs(key_ragged, (2, 3, 7, 5))
    loss_r = focal_loss_heatmap(pred_r, gt_r)
    jax.block_until_ready(loss_r)
    ref_r = _reference(pred_r, gt_r)
    assert jnp.allclose(loss_r, ref_r, rtol=1e-4, atol=1e-4), (loss_r, ref_r)

    print("KERNEL_OK")
</pallas_src>

<mosaic_0001>
module attributes {stable_mosaic.version = 11 : i64} {
  func.func @_focal_kernel(%arg0: i32, %arg1: memref<16x128xf32, #tpu.memory_space<vmem>>, %arg2: memref<16x128xf32, #tpu.memory_space<vmem>>, %arg3: memref<8x128xf32, #tpu.memory_space<vmem>>, %arg4: memref<8x128xf32, #tpu.memory_space<vmem>>) attributes {dimension_semantics = [#tpu.dimension_semantics<arbitrary>], iteration_bounds = array<i64: 1>, scalar_prefetch = 0 : i64, scratch_operands = 0 : i64, tpu.core_type = #tpu.core_type<tc>, window_params = [{transform_indices = @transform_0, window_bounds = array<i64: 16, 128>}, {transform_indices = @transform_1, window_bounds = array<i64: 16, 128>}, {pipeline_mode = #tpu.pipeline_mode<synchronous>, transform_indices = @transform_2, window_bounds = array<i64: 8, 128>}, {pipeline_mode = #tpu.pipeline_mode<synchronous>, transform_indices = @transform_3, window_bounds = array<i64: 8, 128>}]} {
    %c0_i32 = arith.constant 0 : i32
    %0 = arith.cmpi eq, %arg0, %c0_i32 : i32
    %1 = arith.extui %0 : i1 to i32
    %c0_i32_0 = arith.constant 0 : i32
    %2 = arith.cmpi ne, %1, %c0_i32_0 : i32
    scf.if %2 {
      %cst_24 = arith.constant 0.000000e+00 : f32
      %54 = vector.broadcast %cst_24 : f32 to vector<8x128xf32>
      %c0_25 = arith.constant 0 : index
      %c0_26 = arith.constant 0 : index
      %55 = vector.load %arg3[%c0_25, %c0_26] : memref<8x128xf32, #tpu.memory_space<vmem>>, vector<8x128xf32>
      tpu.vector_store %arg3[%c0_25, %c0_26], %54 {strides = array<i32>} : memref<8x128xf32, #tpu.memory_space<vmem>>, vector<8x128xf32>,
      %cst_27 = arith.constant 0.000000e+00 : f32
      %56 = vector.broadcast %cst_27 : f32 to vector<8x128xf32>
      %c0_28 = arith.constant 0 : index
      %c0_29 = arith.constant 0 : index
      %57 = vector.load %arg4[%c0_28, %c0_29] : memref<8x128xf32, #tpu.memory_space<vmem>>, vector<8x128xf32>
      tpu.vector_store %arg4[%c0_28, %c0_29], %56 {strides = array<i32>} : memref<8x128xf32, #tpu.memory_space<vmem>>, vector<8x128xf32>,
    } else {
    }
    %c0 = arith.constant 0 : index
    %c0_1 = arith.constant 0 : index
    %3 = vector.load %arg1[%c0, %c0_1] : memref<16x128xf32, #tpu.memory_space<vmem>>, vector<16x128xf32>
    %c0_2 = arith.constant 0 : index
    %c0_3 = arith.constant 0 : index
    %4 = vector.load %arg2[%c0_2, %c0_3] : memref<16x128xf32, #tpu.memory_space<vmem>>, vector<16x128xf32>
    %cst = arith.constant -3.000000e+01 : f32
    %cst_4 = arith.constant 3.000000e+01 : f32
    %5 = vector.broadcast %cst : f32 to vector<16x128xf32>
    %6 = arith.maximumf %5, %3 : vector<16x128xf32>
    %7 = vector.broadcast %cst_4 : f32 to vector<16x128xf32>
    %8 = arith.minimumf %7, %6 : vector<16x128xf32>
    %cst_5 = arith.constant 0.000000e+00 : f32
    %9 = vector.broadcast %cst_5 : f32 to vector<16x128xf32>
    %10 = arith.subf %9, %8 : vector<16x128xf32>
    %11 = math.exp %10 : vector<16x128xf32>
    %cst_6 = arith.constant 1.000000e+00 : f32
    %12 = vector.broadcast %cst_6 : f32 to vector<16x128xf32>
    %13 = arith.addf %12, %11 : vector<16x128xf32>
    %14 = tpu.reciprocal %13 {approx = true} : vector<16x128xf32> -> vector<16x128xf32>
    %15 = arith.mulf %13, %14 : vector<16x128xf32>
    %cst_7 = arith.constant 2.000000e+00 : f32
    %16 = vector.broadcast %cst_7 : f32 to vector<16x128xf32>
    %17 = arith.subf %16, %15 : vector<16x128xf32>
    %18 = arith.mulf %14, %17 : vector<16x128xf32>
    %19 = arith.mulf %11, %18 : vector<16x128xf32>
    %20 = math.log %13 : vector<16x128xf32>
    %cst_8 = arith.constant 0.000000e+00 : f32
    %21 = vector.broadcast %cst_8 : f32 to vector<16x128xf32>
    %22 = arith.subf %21, %20 : vector<16x128xf32>
    %cst_9 = arith.constant 0.000000e+00 : f32
    %23 = vector.broadcast %cst_9 : f32 to vector<16x128xf32>
    %24 = arith.subf %23, %8 : vector<16x128xf32>
    %25 = arith.subf %24, %20 : vector<16x128xf32>
    %cst_10 = arith.constant 1.000000e+00 : f32
    %26 = vector.broadcast %cst_10 : f32 to vector<16x128xf32>
    %27 = arith.cmpf oeq, %4, %26 : vector<16x128xf32>
    %cst_11 = arith.constant 1.000000e+00 : f32
    %cst_12 = arith.constant 0.000000e+00 : f32
    %28 = vector.broadcast %cst_11 : f32 to vector<16x128xf32>
    %29 = vector.broadcast %cst_12 : f32 to vector<16x128xf32>
    %30 = arith.select %27, %28, %29 : vector<16x128xi1>, vector<16x128xf32>
    %cst_13 = arith.constant 1.000000e+00 : f32
    %31 = vector.broadcast %cst_13 : f32 to vector<16x128xf32>
    %32 = arith.subf %31, %4 : vector<16x128xf32>
    %33 = arith.mulf %32, %32 : vector<16x128xf32>
    %34 = arith.mulf %33, %33 : vector<16x128xf32>
    %35 = arith.mulf %19, %19 : vector<16x128xf32>
    %36 = arith.mulf %35, %19 : vector<16x128xf32>
    %37 = arith.mulf %18, %18 : vector<16x128xf32>
    %38 = arith.mulf %37, %18 : vector<16x128xf32>
    %39 = arith.mulf %36, %22 : vector<16x128xf32>
    %40 = arith.mulf %39, %30 : vector<16x128xf32>
    %41 = arith.mulf %34, %38 : vector<16x128xf32>
    %42 = arith.mulf %41, %25 : vector<16x128xf32>
    %43 = arith.addf %40, %42 : vector<16x128xf32>
    %c0_14 = arith.constant 0 : index
    %c0_15 = arith.constant 0 : index
    %44 = vector.load %arg3[%c0_14, %c0_15] : memref<8x128xf32, #tpu.memory_space<vmem>>, vector<8x128xf32>
    %45 = vector.shape_cast %43 : vector<16x128xf32> to vector<2x8x128xf32>
    %cst_16 = arith.constant dense<0.000000e+00> : vector<8x128xf32>
    %46 = vector.multi_reduction <add>, %45, %cst_16 [0] : vector<2x8x128xf32> to vector<8x128xf32>
    %47 = arith.addf %44, %46 : vector<8x128xf32>
    %c0_17 = arith.constant 0 : index
    %c0_18 = arith.constant 0 : index
    %48 = vector.load %arg3[%c0_17, %c0_18] : memref<8x128xf32, #tpu.memory_space<vmem>>, vector<8x128xf32>
    tpu.vector_store %arg3[%c0_17, %c0_18], %47 {strides = array<i32>} : memref<8x128xf32, #tpu.memory_space<vmem>>, vector<8x128xf32>,
    %c0_19 = arith.constant 0 : index
    %c0_20 = arith.constant 0 : index
    %49 = vector.load %arg4[%c0_19, %c0_20] : memref<8x128xf32, #tpu.memory_space<vmem>>, vector<8x128xf32>
    %50 = vector.shape_cast %30 : vector<16x128xf32> to vector<2x8x128xf32>
    %cst_21 = arith.constant dense<0.000000e+00> : vector<8x128xf32>
    %51 = vector.multi_reduction <add>, %50, %cst_21 [0] : vector<2x8x128xf32> to vector<8x128xf32>
    %52 = arith.addf %49, %51 : vector<8x128xf32>
    %c0_22 = arith.constant 0 : index
    %c0_23 = arith.constant 0 : index
    %53 = vector.load %arg4[%c0_22, %c0_23] : memref<8x128xf32, #tpu.memory_space<vmem>>, vector<8x128xf32>
    tpu.vector_store %arg4[%c0_22, %c0_23], %52 {strides = array<i32>} : memref<8x128xf32, #tpu.memory_space<vmem>>, vector<8x128xf32>,
    return
  }
  func.func @transform_0(%arg0: i32) -> (i32, i32) {
    %c0_i32 = arith.constant 0 : i32
    %c0_i32_0 = arith.constant 0 : i32
    return %arg0, %c0_i32 : i32, i32
  }
  func.func @transform_1(%arg0: i32) -> (i32, i32) {
    %c0_i32 = arith.constant 0 : i32
    %c0_i32_0 = arith.constant 0 : i32
    return %arg0, %c0_i32 : i32, i32
  }
  func.func @transform_2(%arg0: i32) -> (i32, i32) {
    %c0_i32 = arith.constant 0 : i32
    %c0_i32_0 = arith.constant 0 : i32
    %c0_i32_1 = arith.constant 0 : i32
    return %c0_i32, %c0_i32_0 : i32, i32
  }
  func.func @transform_3(%arg0: i32) -> (i32, i32) {
    %c0_i32 = arith.constant 0 : i32
    %c0_i32_0 = arith.constant 0 : i32
    %c0_i32_1 = arith.constant 0 : i32
    return %c0_i32, %c0_i32_0 : i32, i32
  }
}

</mosaic_0001>

<llo_original>
// kernel: tpu_custom_call.1
$region0: #{tpu_custom_call.1}
  #allocation0 [shape = 'u32[]', space=smem, size = 0x4, offset = 0x4, fixed_abs, tag = 'smem constant byte address 0x4 - core index']
  #allocation1 [shape = 'u32[72,128]{1,0:T(1,128)}', space=vmem, size = 0x9000, scoped, tag = 'internal scratch']
  %s0 = inlined_call_operand.hbm [shape: f32[16,128], index: 0, kind: input, shape index: {}]
  %s1 = inlined_call_operand.hbm [shape: f32[16,128], index: 1, kind: input, shape index: {}]
  %s2 = inlined_call_operand.hbm [shape: f32[8,128], index: 2, kind: output, shape index: {0}]
  %s3 = inlined_call_operand.hbm [shape: f32[8,128], index: 3, kind: output, shape index: {1}]
  %4 = xla_tuple %s2, %s3
  %s5 = sld [smem:[#allocation0]]
  $region38: #{tpu_custom_call.1} parent=0
    _
  %s7 = ssub.s32 1, %s5
  %s8 = scalar_select 0, %s7, %s5
  $region1: #{tpu_custom_call.1} parent=0
    #allocation2 [shape = 'u8[8192]{0}', space=vmem, size = 0x2000, scoped, tag = 'input window, operand 0, single buffered']
    #allocation3 [shape = 's32[1]{0}', space=sflag, size = 0x4, scoped, tag = 'scoped memory for tpu_custom_call.1']
    #allocation4 [shape = 's32[1]{0}', space=sflag, size = 0x4, scoped, tag = 'scoped memory for tpu_custom_call.1']
    #allocation5 [shape = 'u8[8192]{0}', space=vmem, size = 0x2000, scoped, tag = 'input window, operand 1, single buffered']
    #allocation6 [shape = 's32[1]{0}', space=sflag, size = 0x4, scoped, tag = 'scoped memory for tpu_custom_call.1']
    #allocation7 [shape = 'u8[4096]{0}', space=vmem, size = 0x1000, scoped, tag = 'output window, operand 0, single buffered']
    #allocation8 [shape = 'u8[4096]{0}', space=vmem, size = 0x1000, scoped, tag = 'output window, operand 1, single buffered']
    #allocation9 [shape = 's32[1]{0}', space=sflag, size = 0x4, scoped, tag = 'scoped memory for tpu_custom_call.1']
    %9 = vsyncpa [#allocation3], 0
    %10 = vsyncpa [#allocation6], 0
    %11 = vsyncpa [#allocation4], 0
    %12 = vsyncpa [#allocation9], 0
    // Predicated region
    $region2: #{tpu_custom_call.1} parent=1 // pred_check
      _
    $region3: #{tpu_custom_call.1} parent=1 // pred_check_branch
      %14 = sbr.rel (0) target = $region5
    $region4: #{tpu_custom_call.1} parent=1 // pred_region
      %16 = vsyncadd [#allocation3], 0
      %s17 = sshll.u32 %s0, 4
      %s18 = int_to_ptr.hbm [resolvable:$true] %s17
      %s19 = sshll.u32 [#allocation2], 4
      %s20 = int_to_ptr.vmem [resolvable:$true] %s19
      %25 = dma.hbm_to_vmem [thread:$0]  %s18, 256, %s20, [#allocation3], 128, 128, 8
    $region5: #{tpu_custom_call.1} parent=1 // pred_fallthru
      _
    // Predicated region
    $region6: #{tpu_custom_call.1} parent=1 // pred_check
      _
    $region7: #{tpu_custom_call.1} parent=1 // pred_check_branch
      %27 = sbr.rel (0) target = $region9
    $region8: #{tpu_custom_call.1} parent=1 // pred_region
      %29 = vsyncadd [#allocation6], 0
      %s30 = sshll.u32 %s1, 4
      %s31 = int_to_ptr.hbm [resolvable:$true] %s30
      %s32 = sshll.u32 [#allocation5], 4
      %s33 = int_to_ptr.vmem [resolvable:$true] %s32
      %38 = dma.hbm_to_vmem [thread:$0]  %s31, 256, %s33, [#allocation6], 128, 128, 8
    $region9: #{tpu_custom_call.1} parent=1 // pred_fallthru
      _
    // Predicated region
    $region10: #{tpu_custom_call.1} parent=1 // pred_check
      _
    $region11: #{tpu_custom_call.1} parent=1 // pred_check_branch
      %40 = sbr.rel (0) target = $region13
    $region12: #{tpu_custom_call.1} parent=1 // pred_region
      %42 = dma.done [#allocation3], 256
    $region13: #{tpu_custom_call.1} parent=1 // pred_fallthru
      _
    // Predicated region
    $region14: #{tpu_custom_call.1} parent=1 // pred_check
      _
    $region15: #{tpu_custom_call.1} parent=1 // pred_check_branch
      %44 = sbr.rel (0) target = $region17
    $region16: #{tpu_custom_call.1} parent=1 // pred_region
      %46 = dma.done [#allocation6], 256
    $region17: #{tpu_custom_call.1} parent=1 // pred_fallthru
      _
    %p47 = scmp.eq.s32.totalorder 0, 0
    // Predicated region
    $region18: #{tpu_custom_call.1} parent=1 // pred_check
      %p48 = pneg %p47
    $region19: #{tpu_custom_call.1} parent=1 // pred_check_branch
      %50 = sbr.rel (%p48) target = $region21
    $region20: #{tpu_custom_call.1} parent=1 // pred_region
      %51 = vst [vmem:[#allocation7] sm:$0xff] 0.0
      %52 = vst [vmem:[#allocation8] sm:$0xff] 0.0
    $region21: #{tpu_custom_call.1} parent=1 // pred_fallthru
      _
    %v53 = vld [vmem:[#allocation2] sm:$0xff]
    %v54 = vld [vmem:[#allocation2 + $0x8] sm:$0xff]
    %v55 = vld [vmem:[#allocation5] sm:$0xff]
    %v56 = vld [vmem:[#allocation5 + $0x8] sm:$0xff]
    %v57 = vmax.f32 %v53, -30.0
    %v58 = vmax.f32 %v54, -30.0
    %v59 = vmin.f32 %v57, 30.0
    %v60 = vmin.f32 %v58, 30.0
    %v61 = vsub.f32 0.0, %v59
    %v62 = vsub.f32 0.0, %v60
    %v63 = vmul.f32 %v61, 1.442695
    %v64 = vpow.pop %v63
    %v65 = vmul.f32 %v62, 1.442695
    %v66 = vpow.pop %v65
    %v67 = vadd.f32 %v64, 1.0
    %v68 = vadd.f32 %v66, 1.0
    %v69 = vrcp.pop %v67
    %v70 = vrcp.pop %v68
    %v71 = vmul.f32 %v67, %v69
    %v72 = vmul.f32 %v68, %v70
    %v73 = vsub.f32 2.0, %v71
    %v74 = vsub.f32 2.0, %v72
    %v75 = vmul.f32 %v69, %v73
    %v76 = vmul.f32 %v70, %v74
    %v77 = vmul.f32 %v64, %v75
    %v78 = vmul.f32 %v66, %v76
    %v79 = vlog2.pop %v67
    %v80 = vmul.f32 %v79, 0.6931472
    %v81 = vlog2.pop %v68
    %v82 = vmul.f32 %v81, 0.6931472
    %v83 = vsub.f32 0.0, %v80
    %v84 = vsub.f32 0.0, %v82
    %v85 = vsub.f32 %v61, %v80
    %v86 = vsub.f32 %v62, %v82
    %vm87 = vcmp.eq.f32.partialorder %v55, 1.0
    %vm88 = vcmp.eq.f32.partialorder %v56, 1.0
    %v89 = vsel %vm87, 1.0, 0.0
    %v90 = vsel %vm88, 1.0, 0.0
    %v91 = vsub.f32 1.0, %v55
    %v92 = vsub.f32 1.0, %v56
    %v93 = vmul.f32 %v91, %v91
    %v94 = vmul.f32 %v92, %v92
    %v95 = vmul.f32 %v93, %v93
    %v96 = vmul.f32 %v94, %v94
    %v97 = vmul.f32 %v77, %v77
    %v98 = vmul.f32 %v78, %v78
    %v99 = vmul.f32 %v97, %v77
    %v100 = vmul.f32 %v98, %v78
    %v101 = vmul.f32 %v75, %v75
    %v102 = vmul.f32 %v76, %v76
    %v103 = vmul.f32 %v101, %v75
    %v104 = vmul.f32 %v102, %v76
    %v105 = vmul.f32 %v99, %v83
    %v106 = vmul.f32 %v100, %v84
    %v107 = vmul.f32 %v105, %v89
    %v108 = vmul.f32 %v106, %v90
    %v109 = vmul.f32 %v95, %v103
    %v110 = vmul.f32 %v96, %v104
    %v111 = vmul.f32 %v109, %v85
    %v112 = vmul.f32 %v110, %v86
    %v113 = vadd.f32 %v107, %v111
    %v114 = vadd.f32 %v108, %v112
    %v115 = vld [vmem:[#allocation7] sm:$0xff]
    %v116 = vadd.f32 %v113, %v114
    %v117 = vadd.f32 %v115, %v116
    %118 = vst [vmem:[#allocation7] sm:$0xff] %v117
    %v119 = vld [vmem:[#allocation8] sm:$0xff]
    %v120 = vadd.f32 %v89, %v90
    %v121 = vadd.f32 %v119, %v120
    %122 = vst [vmem:[#allocation8] sm:$0xff] %v121
    // Predicated region
    $region22: #{tpu_custom_call.1} parent=1 // pred_check
      _
    $region23: #{tpu_custom_call.1} parent=1 // pred_check_branch
      %124 = sbr.rel (0) target = $region25
    $region24: #{tpu_custom_call.1} parent=1 // pred_region
      %126 = vsyncadd [#allocation4], 0
      %s128 = sshll.u32 [#allocation7], 4
      %s129 = int_to_ptr.vmem [resolvable:$true] %s128
      %s130 = sshll.u32 %s2, 4
      %s131 = int_to_ptr.hbm [resolvable:$true] %s130
      %133 = dma.vmem_to_hbm [thread:$0]  %s129, 128, %s131, [#allocation4]
    $region25: #{tpu_custom_call.1} parent=1 // pred_fallthru
      _
    // Predicated region
    $region26: #{tpu_custom_call.1} parent=1 // pred_check
      _
    $region27: #{tpu_custom_call.1} parent=1 // pred_check_branch
      %135 = sbr.rel (0) target = $region29
    $region28: #{tpu_custom_call.1} parent=1 // pred_region
      %137 = vsyncadd [#allocation9], 0
      %s139 = sshll.u32 [#allocation8], 4
      %s140 = int_to_ptr.vmem [resolvable:$true] %s139
      %s141 = sshll.u32 %s3, 4
      %s142 = int_to_ptr.hbm [resolvable:$true] %s141
      %144 = dma.vmem_to_hbm [thread:$0]  %s140, 128, %s142, [#allocation9]
    $region29: #{tpu_custom_call.1} parent=1 // pred_fallthru
      _
    // Predicated region
    $region30: #{tpu_custom_call.1} parent=1 // pred_check
      _
    $region31: #{tpu_custom_call.1} parent=1 // pred_check_branch
      %146 = sbr.rel (0) target = $region33
    $region32: #{tpu_custom_call.1} parent=1 // pred_region
      %148 = dma.done [#allocation4], 128
    $region33: #{tpu_custom_call.1} parent=1 // pred_fallthru
      _
    // Predicated region
    $region34: #{tpu_custom_call.1} parent=1 // pred_check
      _
    $region35: #{tpu_custom_call.1} parent=1 // pred_check_branch
      %150 = sbr.rel (0) target = $region37
    $region36: #{tpu_custom_call.1} parent=1 // pred_region
      %152 = dma.done [#allocation9], 128
    $region37: #{tpu_custom_call.1} parent=1 // pred_fallthru
      _
    %153 = vsyncpa [#allocation3], 1
    %154 = vsyncpa [#allocation6], 1
    %155 = vsyncpa [#allocation4], 1
    %156 = vsyncpa [#allocation9], 1

</llo_original>
